<compile_context>
chip_gen: v6e
topology: v6e:2x2x1
jax: 0.10.0
libtpu: 0.0.40
codegen_flags: <defaults>
</compile_context>

<pallas_src>
import functools

import jax
import jax.numpy as jnp
from jax.experimental import pallas as pl
from jax.experimental.pallas import tpu as pltpu


HIDDEN = 256     # hidden width of the MLP (nn.Linear(..., 256))
HEAD_PAD = 128   # fused [advantages | value | 0-pad] head -> one 128-lane tile


def _round_up(x, m):
    return (x + m - 1) // m * m


# ---------------------------------------------------------------------------
# Shared MLP trunk + fused dueling head (one (tb, input_dim) batch tile)
# ---------------------------------------------------------------------------
def _trunk(x_ref, w1_ref, b1_ref, w2_ref, b2_ref, w3_ref, b3_ref, wh_ref, bh_ref):
    f32, bf16 = jnp.float32, jnp.bfloat16
    h = x_ref[...].astype(bf16)                                            # (tb, in)
    h = jnp.dot(h, w1_ref[...], preferred_element_type=f32) + b1_ref[...]  # f32 acc/bias
    h = jnp.maximum(h, 0.0).astype(bf16)
    h = jnp.dot(h, w2_ref[...], preferred_element_type=f32) + b2_ref[...]
    h = jnp.maximum(h, 0.0).astype(bf16)
    h = jnp.dot(h, w3_ref[...], preferred_element_type=f32) + b3_ref[...]
    h = jnp.maximum(h, 0.0).astype(bf16)
    # cols [0, O): advantages, col O: state value, cols > O: exact zeros.
    return jnp.dot(h, wh_ref[...], preferred_element_type=f32) + bh_ref[...]  # (tb,128) f32


# ---------------------------------------------------------------------------
# Path 1 kernel: fully fused (trunk + global adv mean + combine), grid=(1,)
# ---------------------------------------------------------------------------
def _fused_kernel(x_ref, w1_ref, b1_ref, w2_ref, b2_ref, w3_ref, b3_ref,
                  wh_ref, bh_ref, q_ref, *, output_dim, batch):
    head = _trunk(x_ref, w1_ref, b1_ref, w2_ref, b2_ref, w3_ref, b3_ref,
                  wh_ref, bh_ref)                                  # (batch, 128) f32
    value = head[:, output_dim:output_dim + 1]                     # (batch, 1)
    # Pad columns are exact zeros, so sum(head) - sum(value) == sum(advantages).
    adv_mean = (jnp.sum(head) - jnp.sum(value)) * (1.0 / float(batch * output_dim))
    # Lane-dense 128-wide store; only cols [0, output_dim) are real Q values.
    q_ref[...] = head + value - adv_mean


# ---------------------------------------------------------------------------
# Path 2 kernel: batch-tiled trunk; emits bf16 head + per-tile adv partial sum
# ---------------------------------------------------------------------------
def _tiled_kernel(x_ref, w1_ref, b1_ref, w2_ref, b2_ref, w3_ref, b3_ref,
                  wh_ref, bh_ref, head_ref, psum_ref, *, output_dim, batch, tb):
    head = _trunk(x_ref, w1_ref, b1_ref, w2_ref, b2_ref, w3_ref, b3_ref,
                  wh_ref, bh_ref)                                  # (tb, 128) f32
    value = head[:, output_dim:output_dim + 1]                     # (tb, 1)
    # Per-row advantage sums (pad cols are exact zeros for real rows).  Rows past
    # `batch` in the final (out-of-bounds) tile are garbage -> mask them to zero
    # so they never pollute the global mean.
    row_adv = jnp.sum(head, axis=1, keepdims=True) - value         # (tb, 1)
    rows = jax.lax.broadcasted_iota(jnp.int32, (tb, 1), 0) + pl.program_id(0) * tb
    tile_sum = jnp.sum(jnp.where(rows < batch, row_adv, 0.0))
    psum_ref[...] = jnp.zeros((1, HEAD_PAD), jnp.float32) + tile_sum
    head_ref[...] = head.astype(head_ref.dtype)                    # bf16 intermediate


# ---------------------------------------------------------------------------
# Wrapper
# ---------------------------------------------------------------------------
def dueling_q_forward(x, params, *, output_dim, block_batch=1024, fuse_max_batch=256):
    """x: (batch, input_dim) f32; params: packed kernel params (see prepare_params)."""
    batch, input_dim = x.shape
    assert params["w1"].shape == (input_dim, HIDDEN)

    weights = (params["w1"], params["b1"], params["w2"], params["b2"],
               params["w3"], params["b3"], params["wh"], params["bh"])
    w_bytes = sum(int(w.size) * w.dtype.itemsize for w in weights)
    flops = 2 * batch * (input_dim * HIDDEN + 2 * HIDDEN * HIDDEN + HIDDEN * HEAD_PAD)

    def resident(shape):   # weight/bias stays VMEM-resident across all batch tiles
        return pl.BlockSpec(shape, lambda i: (0, 0))

    w_specs = [
        resident((input_dim, HIDDEN)), resident((1, HIDDEN)),    # L1
        resident((HIDDEN, HIDDEN)), resident((1, HIDDEN)),       # L2
        resident((HIDDEN, HIDDEN)), resident((1, HIDDEN)),       # L3
        resident((HIDDEN, HEAD_PAD)), resident((1, HEAD_PAD)),   # fused [adv|value] head
    ]

    if batch <= fuse_max_batch:
        # ---- Path 1: single fully-fused kernel (trunk + mean + combine) ----
        q_pad = pl.pallas_call(
            functools.partial(_fused_kernel, output_dim=output_dim, batch=batch),
            out_shape=jax.ShapeDtypeStruct((batch, HEAD_PAD), jnp.float32),
            grid=(1,),
            in_specs=[pl.BlockSpec((batch, input_dim), lambda i: (0, 0))] + w_specs,
            out_specs=pl.BlockSpec((batch, HEAD_PAD), lambda i: (0, 0)),
            compiler_params=pltpu.CompilerParams(dimension_semantics=("parallel",)),
            cost_estimate=pl.CostEstimate(
                flops=flops, transcendentals=0,
                bytes_accessed=batch * input_dim * 4 + w_bytes + batch * HEAD_PAD * 4),
        )(x, *weights)
        # Only cols [0, output_dim) of the lane-dense padded tile are real Q.
        return q_pad[:, :output_dim]

    # ---- Path 2: batch-tiled kernel, >= 2 tiles so both v7x cores get work ----
    # 16-row alignment so the bf16 head tile obeys the (16, 128) bf16 tiling rule.
    tb = max(16, min(block_batch, _round_up(pl.cdiv(batch, 2), 16)))
    grid = pl.cdiv(batch, tb)

    head, psums = pl.pallas_call(
        functools.partial(_tiled_kernel, output_dim=output_dim, batch=batch, tb=tb),
        out_shape=(jax.ShapeDtypeStruct((batch, HEAD_PAD), jnp.bfloat16),
                   jax.ShapeDtypeStruct((1, grid * HEAD_PAD), jnp.float32)),
        grid=(grid,),
        in_specs=[pl.BlockSpec((tb, input_dim), lambda i: (i, 0))] + w_specs,
        out_specs=(pl.BlockSpec((tb, HEAD_PAD), lambda i: (i, 0)),
                   pl.BlockSpec((1, HEAD_PAD), lambda i: (0, i))),
        compiler_params=pltpu.CompilerParams(dimension_semantics=("parallel",)),
        cost_estimate=pl.CostEstimate(
            flops=flops, transcendentals=0,
            bytes_accessed=(batch * input_dim * 4 + w_bytes
                            + batch * HEAD_PAD * 2 + grid * HEAD_PAD * 4)),
    )(x, *weights)

    # Global advantage mean from per-tile partial sums (each tile wrote its f32
    # partial sum broadcast across 128 lanes) — no re-read of `head` for the mean.
    adv_mean = jnp.sum(psums) * (1.0 / float(HEAD_PAD * batch * output_dim))
    # Q = adv + value - mean: one fused XLA elementwise op; the output_dim slice
    # folds into it (no separate padded-buffer slice pass).
    headf = head.astype(jnp.float32)
    return headf[:, :output_dim] + headf[:, output_dim:output_dim + 1] - adv_mean


# ---------------------------------------------------------------------------
# Parameter construction (synthetic, torch.nn.Linear-like init)
# ---------------------------------------------------------------------------
def init_params(key, input_dim=144, hidden=HIDDEN, output_dim=40):
    """Raw f32 params with the PyTorch module's logical shapes ((in, out) weights)."""
    ks = jax.random.split(key, 10)

    def linear(kw, kb, fan_in, fan_out):
        bound = 1.0 / jnp.sqrt(jnp.float32(fan_in))
        w = jax.random.uniform(kw, (fan_in, fan_out), jnp.float32, -bound, bound)
        b = jax.random.uniform(kb, (1, fan_out), jnp.float32, -bound, bound)
        return w, b

    w1, b1 = linear(ks[0], ks[1], input_dim, hidden)
    w2, b2 = linear(ks[2], ks[3], hidden, hidden)
    w3, b3 = linear(ks[4], ks[5], hidden, hidden)
    wv, bv = linear(ks[6], ks[7], hidden, 1)
    wa, ba = linear(ks[8], ks[9], hidden, output_dim)
    return dict(w1=w1, b1=b1, w2=w2, b2=b2, w3=w3, b3=b3,
                wv=wv, bv=bv, wa=wa, ba=ba)


def prepare_params(raw, *, output_dim, head_pad=HEAD_PAD):
    """One-time packing: fuse [adv|value] heads into one 128-lane tile and store
    weight matrices as bf16 (biases stay f32 so bias adds happen in f32).
    No K padding of w1 — the kernel consumes x at its natural input_dim."""
    hidden = raw["w2"].shape[0]
    wh = jnp.zeros((hidden, head_pad), jnp.float32)
    wh = wh.at[:, :output_dim].set(raw["wa"]).at[:, output_dim:output_dim + 1].set(raw["wv"])
    bh = jnp.zeros((1, head_pad), jnp.float32)
    bh = bh.at[:, :output_dim].set(raw["ba"]).at[:, output_dim:output_dim + 1].set(raw["bv"])
    bf16 = jnp.bfloat16
    return dict(w1=raw["w1"].astype(bf16), b1=raw["b1"],
                w2=raw["w2"].astype(bf16), b2=raw["b2"],
                w3=raw["w3"].astype(bf16), b3=raw["b3"],
                wh=wh.astype(bf16), bh=bh)


# ---------------------------------------------------------------------------
# References for correctness checks
# ---------------------------------------------------------------------------
def reference_forward_f32(x, raw):
    """Pure-f32 JAX reference of the original PyTorch module."""
    h = jnp.maximum(x @ raw["w1"] + raw["b1"], 0.0)
    h = jnp.maximum(h @ raw["w2"] + raw["b2"], 0.0)
    h = jnp.maximum(h @ raw["w3"] + raw["b3"], 0.0)
    value = h @ raw["wv"] + raw["bv"]
    adv = h @ raw["wa"] + raw["ba"]
    return value + adv - jnp.mean(adv)


def reference_forward_bf16(x, raw, *, round_head_to_bf16=False):
    """Mirrors the kernel's bf16 weight/activation casts.  With round_head_to_bf16,
    also mirrors the bf16 storage of the head intermediate used on the batch-tiled
    path (the global advantage mean is taken from the un-rounded f32 advantages,
    exactly as the kernel does)."""
    bf16, f32 = jnp.bfloat16, jnp.float32

    def lin(h, w, b):
        return jnp.dot(h.astype(bf16), w.astype(bf16), preferred_element_type=f32) + b

    h = jnp.maximum(lin(x, raw["w1"], raw["b1"]), 0.0)
    h = jnp.maximum(lin(h, raw["w2"], raw["b2"]), 0.0)
    h = jnp.maximum(lin(h, raw["w3"], raw["b3"]), 0.0)
    value = lin(h, raw["wv"], raw["bv"])
    adv = lin(h, raw["wa"], raw["ba"])
    adv_mean = jnp.mean(adv)
    if round_head_to_bf16:
        value = value.astype(bf16).astype(f32)
        adv = adv.astype(bf16).astype(f32)
    return value + adv - adv_mean


if __name__ == "__main__":
    key = jax.random.PRNGKey(0)
    k_param, k_x1, k_x2 = jax.random.split(key, 3)

    input_dim, output_dim = 144, 40   # module defaults
    raw = init_params(k_param, input_dim=input_dim, output_dim=output_dim)
    params = prepare_params(raw, output_dim=output_dim)

    fwd = jax.jit(functools.partial(dueling_q_forward, output_dim=output_dim))

    # ---- Path 1: small batch -> single fully-fused kernel (grid=(1,)) ----
    batch1 = 44
    x1 = jax.random.normal(k_x1, (batch1, input_dim), jnp.float32)
    q1 = jax.block_until_ready(fwd(x1, params))
    assert q1.shape == (batch1, output_dim)
    assert jnp.allclose(q1, reference_forward_bf16(x1, raw), atol=1e-3, rtol=1e-3), \
        "fused path: mismatch vs bf16-mirrored reference"
    assert jnp.allclose(q1, reference_forward_f32(x1, raw), atol=5e-2, rtol=5e-2), \
        "fused path: mismatch vs f32 reference"

    # ---- Path 2: larger batch -> batch-tiled kernel (grid=2, partial last tile) ----
    batch2 = 300
    x2 = jax.random.normal(k_x2, (batch2, input_dim), jnp.float32)
    q2 = jax.block_until_ready(fwd(x2, params))
    assert q2.shape == (batch2, output_dim)
    assert jnp.allclose(q2, reference_forward_bf16(x2, raw, round_head_to_bf16=True),
                        atol=5e-3, rtol=5e-3), \
        "tiled path: mismatch vs bf16-mirrored reference"
    assert jnp.allclose(q2, reference_forward_f32(x2, raw), atol=5e-2, rtol=5e-2), \
        "tiled path: mismatch vs f32 reference"

    print("KERNEL_OK")
</pallas_src>

<mosaic_0001>
module attributes {stable_mosaic.version = 11 : i64} {
  func.func @_fused_kernel(%arg0: i32, %arg1: memref<44x144xf32, #tpu.memory_space<vmem>>, %arg2: memref<144x256xbf16, #tpu.memory_space<vmem>>, %arg3: memref<1x256xf32, #tpu.memory_space<vmem>>, %arg4: memref<256x256xbf16, #tpu.memory_space<vmem>>, %arg5: memref<1x256xf32, #tpu.memory_space<vmem>>, %arg6: memref<256x256xbf16, #tpu.memory_space<vmem>>, %arg7: memref<1x256xf32, #tpu.memory_space<vmem>>, %arg8: memref<256x128xbf16, #tpu.memory_space<vmem>>, %arg9: memref<1x128xf32, #tpu.memory_space<vmem>>, %arg10: memref<44x128xf32, #tpu.memory_space<vmem>>) attributes {dimension_semantics = [#tpu.dimension_semantics<parallel>], iteration_bounds = array<i64: 1>, scalar_prefetch = 0 : i64, scratch_operands = 0 : i64, tpu.core_type = #tpu.core_type<tc>, window_params = [{pipeline_mode = #tpu.pipeline_mode<synchronous>, transform_indices = @transform_0, window_bounds = array<i64: 44, 144>}, {pipeline_mode = #tpu.pipeline_mode<synchronous>, transform_indices = @transform_1, window_bounds = array<i64: 144, 256>}, {pipeline_mode = #tpu.pipeline_mode<synchronous>, transform_indices = @transform_2, window_bounds = array<i64: 1, 256>}, {pipeline_mode = #tpu.pipeline_mode<synchronous>, transform_indices = @transform_3, window_bounds = array<i64: 256, 256>}, {pipeline_mode = #tpu.pipeline_mode<synchronous>, transform_indices = @transform_4, window_bounds = array<i64: 1, 256>}, {pipeline_mode = #tpu.pipeline_mode<synchronous>, transform_indices = @transform_5, window_bounds = array<i64: 256, 256>}, {pipeline_mode = #tpu.pipeline_mode<synchronous>, transform_indices = @transform_6, window_bounds = array<i64: 1, 256>}, {pipeline_mode = #tpu.pipeline_mode<synchronous>, transform_indices = @transform_7, window_bounds = array<i64: 256, 128>}, {pipeline_mode = #tpu.pipeline_mode<synchronous>, transform_indices = @transform_8, window_bounds = array<i64: 1, 128>}, {pipeline_mode = #tpu.pipeline_mode<synchronous>, transform_indices = @transform_9, window_bounds = array<i64: 44, 128>}]} {
    %c0 = arith.constant 0 : index
    %c0_0 = arith.constant 0 : index
    %0 = vector.load %arg1[%c0, %c0_0] : memref<44x144xf32, #tpu.memory_space<vmem>>, vector<44x144xf32>
    %1 = arith.truncf %0 : vector<44x144xf32> to vector<44x144xbf16>
    %c0_1 = arith.constant 0 : index
    %c0_2 = arith.constant 0 : index
    %2 = vector.load %arg2[%c0_1, %c0_2] : memref<144x256xbf16, #tpu.memory_space<vmem>>, vector<144x256xbf16>
    %cst = arith.constant dense<0.000000e+00> : vector<44x256xf32>
    %3 = tpu.matmul %1, %2, %cst {dimension_numbers = #tpu.dot_dimension_numbers<[1], [0], [0], [1], [0, 0, 1, 1], [], []>} : vector<44x144xbf16>, vector<144x256xbf16>, vector<44x256xf32> -> vector<44x256xf32>
    %c0_3 = arith.constant 0 : index
    %c0_4 = arith.constant 0 : index
    %4 = vector.load %arg3[%c0_3, %c0_4] : memref<1x256xf32, #tpu.memory_space<vmem>>, vector<1x256xf32>
    %5 = vector.broadcast %4 : vector<1x256xf32> to vector<44x256xf32>
    %6 = arith.addf %3, %5 : vector<44x256xf32>
    %cst_5 = arith.constant 0.000000e+00 : f32
    %7 = vector.broadcast %cst_5 : f32 to vector<44x256xf32>
    %8 = arith.maximumf %6, %7 : vector<44x256xf32>
    %9 = arith.truncf %8 : vector<44x256xf32> to vector<44x256xbf16>
    %c0_6 = arith.constant 0 : index
    %c0_7 = arith.constant 0 : index
    %10 = vector.load %arg4[%c0_6, %c0_7] : memref<256x256xbf16, #tpu.memory_space<vmem>>, vector<256x256xbf16>
    %cst_8 = arith.constant dense<0.000000e+00> : vector<44x256xf32>
    %11 = tpu.matmul %9, %10, %cst_8 {dimension_numbers = #tpu.dot_dimension_numbers<[1], [0], [0], [1], [0, 0, 1, 1], [], []>} : vector<44x256xbf16>, vector<256x256xbf16>, vector<44x256xf32> -> vector<44x256xf32>
    %c0_9 = arith.constant 0 : index
    %c0_10 = arith.constant 0 : index
    %12 = vector.load %arg5[%c0_9, %c0_10] : memref<1x256xf32, #tpu.memory_space<vmem>>, vector<1x256xf32>
    %13 = vector.broadcast %12 : vector<1x256xf32> to vector<44x256xf32>
    %14 = arith.addf %11, %13 : vector<44x256xf32>
    %cst_11 = arith.constant 0.000000e+00 : f32
    %15 = vector.broadcast %cst_11 : f32 to vector<44x256xf32>
    %16 = arith.maximumf %14, %15 : vector<44x256xf32>
    %17 = arith.truncf %16 : vector<44x256xf32> to vector<44x256xbf16>
    %c0_12 = arith.constant 0 : index
    %c0_13 = arith.constant 0 : index
    %18 = vector.load %arg6[%c0_12, %c0_13] : memref<256x256xbf16, #tpu.memory_space<vmem>>, vector<256x256xbf16>
    %cst_14 = arith.constant dense<0.000000e+00> : vector<44x256xf32>
    %19 = tpu.matmul %17, %18, %cst_14 {dimension_numbers = #tpu.dot_dimension_numbers<[1], [0], [0], [1], [0, 0, 1, 1], [], []>} : vector<44x256xbf16>, vector<256x256xbf16>, vector<44x256xf32> -> vector<44x256xf32>
    %c0_15 = arith.constant 0 : index
    %c0_16 = arith.constant 0 : index
    %20 = vector.load %arg7[%c0_15, %c0_16] : memref<1x256xf32, #tpu.memory_space<vmem>>, vector<1x256xf32>
    %21 = vector.broadcast %20 : vector<1x256xf32> to vector<44x256xf32>
    %22 = arith.addf %19, %21 : vector<44x256xf32>
    %cst_17 = arith.constant 0.000000e+00 : f32
    %23 = vector.broadcast %cst_17 : f32 to vector<44x256xf32>
    %24 = arith.maximumf %22, %23 : vector<44x256xf32>
    %25 = arith.truncf %24 : vector<44x256xf32> to vector<44x256xbf16>
    %c0_18 = arith.constant 0 : index
    %c0_19 = arith.constant 0 : index
    %26 = vector.load %arg8[%c0_18, %c0_19] : memref<256x128xbf16, #tpu.memory_space<vmem>>, vector<256x128xbf16>
    %cst_20 = arith.constant dense<0.000000e+00> : vector<44x128xf32>
    %27 = tpu.matmul %25, %26, %cst_20 {dimension_numbers = #tpu.dot_dimension_numbers<[1], [0], [0], [1], [0, 0, 1, 1], [], []>} : vector<44x256xbf16>, vector<256x128xbf16>, vector<44x128xf32> -> vector<44x128xf32>
    %c0_21 = arith.constant 0 : index
    %c0_22 = arith.constant 0 : index
    %28 = vector.load %arg9[%c0_21, %c0_22] : memref<1x128xf32, #tpu.memory_space<vmem>>, vector<1x128xf32>
    %29 = vector.broadcast %28 : vector<1x128xf32> to vector<44x128xf32>
    %30 = arith.addf %27, %29 : vector<44x128xf32>
    %31 = vector.extract_strided_slice %30 {offsets = [0, 40], sizes = [44, 1], strides = [1, 1]} : vector<44x128xf32> to vector<44x1xf32>
    %32 = vector.shape_cast %30 : vector<44x128xf32> to vector<1x44x128xf32>
    %cst_23 = arith.constant dense<0.000000e+00> : vector<1xf32>
    %33 = vector.multi_reduction <add>, %32, %cst_23 [1, 2] : vector<1x44x128xf32> to vector<1xf32>
    %34 = vector.shape_cast %33 : vector<1xf32> to vector<1x1x1xf32>
    %35 = vector.extract %34[0, 0, 0] : f32 from vector<1x1x1xf32>
    %36 = vector.shape_cast %31 : vector<44x1xf32> to vector<1x44x1xf32>
    %cst_24 = arith.constant dense<0.000000e+00> : vector<1xf32>
    %37 = vector.multi_reduction <add>, %36, %cst_24 [1, 2] : vector<1x44x1xf32> to vector<1xf32>
    %38 = vector.shape_cast %37 : vector<1xf32> to vector<1x1x1xf32>
    %39 = vector.extract %38[0, 0, 0] : f32 from vector<1x1x1xf32>
    %40 = arith.subf %35, %39 : f32
    %cst_25 = arith.constant 5.681818E-4 : f32
    %41 = arith.mulf %40, %cst_25 : f32
    %42 = vector.broadcast %31 : vector<44x1xf32> to vector<44x128xf32>
    %43 = arith.addf %30, %42 : vector<44x128xf32>
    %44 = vector.broadcast %41 : f32 to vector<44x128xf32>
    %45 = arith.subf %43, %44 : vector<44x128xf32>
    %c0_26 = arith.constant 0 : index
    %c0_27 = arith.constant 0 : index
    %46 = vector.load %arg10[%c0_26, %c0_27] : memref<44x128xf32, #tpu.memory_space<vmem>>, vector<44x128xf32>
    tpu.vector_store %arg10[%c0_26, %c0_27], %45 {strides = array<i32>} : memref<44x128xf32, #tpu.memory_space<vmem>>, vector<44x128xf32>,
    return
  }
  func.func @transform_0(%arg0: i32) -> (i32, i32) {
    %c0_i32 = arith.constant 0 : i32
    %c0_i32_0 = arith.constant 0 : i32
    %c0_i32_1 = arith.constant 0 : i32
    return %c0_i32, %c0_i32_0 : i32, i32
  }
  func.func @transform_1(%arg0: i32) -> (i32, i32) {
    %c0_i32 = arith.constant 0 : i32
    %c0_i32_0 = arith.constant 0 : i32
    %c0_i32_1 = arith.constant 0 : i32
    return %c0_i32, %c0_i32_0 : i32, i32
  }
  func.func @transform_2(%arg0: i32) -> (i32, i32) {
    %c0_i32 = arith.constant 0 : i32
    %c0_i32_0 = arith.constant 0 : i32
    %c0_i32_1 = arith.constant 0 : i32
    return %c0_i32, %c0_i32_0 : i32, i32
  }
  func.func @transform_3(%arg0: i32) -> (i32, i32) {
    %c0_i32 = arith.constant 0 : i32
    %c0_i32_0 = arith.constant 0 : i32
    %c0_i32_1 = arith.constant 0 : i32
    return %c0_i32, %c0_i32_0 : i32, i32
  }
  func.func @transform_4(%arg0: i32) -> (i32, i32) {
    %c0_i32 = arith.constant 0 : i32
    %c0_i32_0 = arith.constant 0 : i32
    %c0_i32_1 = arith.constant 0 : i32
    return %c0_i32, %c0_i32_0 : i32, i32
  }
  func.func @transform_5(%arg0: i32) -> (i32, i32) {
    %c0_i32 = arith.constant 0 : i32
    %c0_i32_0 = arith.constant 0 : i32
    %c0_i32_1 = arith.constant 0 : i32
    return %c0_i32, %c0_i32_0 : i32, i32
  }
  func.func @transform_6(%arg0: i32) -> (i32, i32) {
    %c0_i32 = arith.constant 0 : i32
    %c0_i32_0 = arith.constant 0 : i32
    %c0_i32_1 = arith.constant 0 : i32
    return %c0_i32, %c0_i32_0 : i32, i32
  }
  func.func @transform_7(%arg0: i32) -> (i32, i32) {
    %c0_i32 = arith.constant 0 : i32
    %c0_i32_0 = arith.constant 0 : i32
    %c0_i32_1 = arith.constant 0 : i32
    return %c0_i32, %c0_i32_0 : i32, i32
  }
  func.func @transform_8(%arg0: i32) -> (i32, i32) {
    %c0_i32 = arith.constant 0 : i32
    %c0_i32_0 = arith.constant 0 : i32
    %c0_i32_1 = arith.constant 0 : i32
    return %c0_i32, %c0_i32_0 : i32, i32
  }
  func.func @transform_9(%arg0: i32) -> (i32, i32) {
    %c0_i32 = arith.constant 0 : i32
    %c0_i32_0 = arith.constant 0 : i32
    %c0_i32_1 = arith.constant 0 : i32
    return %c0_i32, %c0_i32_0 : i32, i32
  }
}

</mosaic_0001>

<llo_original>
// kernel: dueling_q_forward.1
$region0: #{dueling_q_forward.1}
  #allocation0 [shape = 'u32[]', space=smem, size = 0x4, offset = 0x4, fixed_abs, tag = 'smem constant byte address 0x4 - core index']
  #allocation1 [shape = 'u32[144,128]{1,0:T(1,128)}', space=vmem, size = 0x12000, scoped, tag = 'internal scratch']
  %s0 = inlined_call_operand.hbm [shape: f32[44,144], index: 0, kind: input, shape index: {}]
  %s1 = inlined_call_operand.hbm [shape: bf16[144,256], index: 1, kind: input, shape index: {}]
  %s2 = inlined_call_operand.hbm [shape: f32[1,256], index: 2, kind: input, shape index: {}]
  %s3 = inlined_call_operand.hbm [shape: bf16[256,256], index: 3, kind: input, shape index: {}]
  %s4 = inlined_call_operand.vmem [shape: f32[1,256], index: 4, kind: input, shape index: {}]
  %s5 = inlined_call_operand.hbm [shape: bf16[256,256], index: 5, kind: input, shape index: {}]
  %s6 = inlined_call_operand.vmem [shape: f32[1,256], index: 6, kind: input, shape index: {}]
  %s7 = inlined_call_operand.hbm [shape: bf16[256,128], index: 7, kind: input, shape index: {}]
  %s8 = inlined_call_operand.vmem [shape: f32[1,128], index: 8, kind: input, shape index: {}]
  %s9 = inlined_call_operand.vmem [shape: f32[44,128], index: 9, kind: output, shape index: {}]
  %s10 = sld [smem:[#allocation0]]
  $region70: #{dueling_q_forward.1} parent=0
    _
  %s12 = ssub.s32 1, %s10
  %s13 = scalar_select 0, %s12, %s10
  $region1: #{dueling_q_forward.1} parent=0
    #allocation2 [shape = 'u8[49152]{0}', space=vmem, size = 0xc000, scoped, tag = 'input window, operand 0, single buffered']
    #allocation3 [shape = 's32[1]{0}', space=sflag, size = 0x4, scoped, tag = 'scoped memory for dueling_q_forward.1']
    #allocation4 [shape = 'u8[73728]{0}', space=vmem, size = 0x12000, scoped, tag = 'input window, operand 1, single buffered']
    #allocation5 [shape = 's32[1]{0}', space=sflag, size = 0x4, scoped, tag = 'scoped memory for dueling_q_forward.1']
    #allocation6 [shape = 'u8[1024]{0}', space=vmem, size = 0x400, scoped, tag = 'input window, operand 2, single buffered']
    #allocation7 [shape = 'u8[131072]{0}', space=vmem, size = 0x20000, scoped, tag = 'input window, operand 3, single buffered']
    #allocation8 [shape = 's32[1]{0}', space=sflag, size = 0x4, scoped, tag = 'scoped memory for dueling_q_forward.1']
    #allocation9 [shape = 'u8[131072]{0}', space=vmem, size = 0x20000, scoped, tag = 'input window, operand 5, single buffered']
    #allocation10 [shape = 'u8[65536]{0}', space=vmem, size = 0x10000, scoped, tag = 'input window, operand 7, single buffered']
    #allocation11 [shape = 's32[1]{0}', space=sflag, size = 0x4, scoped, tag = 'scoped memory for dueling_q_forward.1']
    %14 = vsyncpa [#allocation3], 0
    %15 = vsyncpa [#allocation5], 0
    %16 = vsyncpa [#allocation8], 0
    %17 = vsyncpa [#allocation11], 0
    // Predicated region
    $region2: #{dueling_q_forward.1} parent=1 // pred_check
      _
    $region3: #{dueling_q_forward.1} parent=1 // pred_check_branch
      %19 = sbr.rel (0) target = $region5
    $region4: #{dueling_q_forward.1} parent=1 // pred_region
      %s21 = ssub.s32 1536, 1536
      %22 = vsyncadd [#allocation3], %s21
      %s23 = sshll.u32 [#allocation2], 4
      %s24 = int_to_ptr.vmem [resolvable:$true] %s23
      %29 = dma.hbm_to_vmem [thread:$0]  %s0, 1536, %s24, [#allocation3], 256, 256, 16
    $region5: #{dueling_q_forward.1} parent=1 // pred_fallthru
      _
    // Predicated region
    $region6: #{dueling_q_forward.1} parent=1 // pred_check
      _
    $region7: #{dueling_q_forward.1} parent=1 // pred_check_branch
      %31 = sbr.rel (0) target = $region9
    $region8: #{dueling_q_forward.1} parent=1 // pred_region
      %s33 = ssub.s32 2304, 2304
      %34 = vsyncadd [#allocation5], %s33
      %s35 = sshll.u32 [#allocation4], 4
      %s36 = int_to_ptr.vmem [resolvable:$true] %s35
      %41 = dma.hbm_to_vmem [thread:$0]  %s1, 2304, %s36, [#allocation5], 128, 128, 8
    $region9: #{dueling_q_forward.1} parent=1 // pred_fallthru
      _
    // Predicated region
    $region10: #{dueling_q_forward.1} parent=1 // pred_check
      _
    $region11: #{dueling_q_forward.1} parent=1 // pred_check_branch
      %43 = sbr.rel (0) target = $region13
    $region12: #{dueling_q_forward.1} parent=1 // pred_region
      %s45 = ssub.s32 32, 32
      %46 = vsyncadd [#allocation5], %s45
      %s48 = sshll.u32 [#allocation6], 4
      %s49 = int_to_ptr.vmem [resolvable:$true] %s48
      %51 = dma.hbm_to_vmem [thread:$0]  %s2, 32, %s49, [#allocation5]
    $region13: #{dueling_q_forward.1} parent=1 // pred_fallthru
      _
    // Predicated region
    $region14: #{dueling_q_forward.1} parent=1 // pred_check
      _
    $region15: #{dueling_q_forward.1} parent=1 // pred_check_branch
      %53 = sbr.rel (0) target = $region17
    $region16: #{dueling_q_forward.1} parent=1 // pred_region
      %s55 = ssub.s32 4096, 4096
      %56 = vsyncadd [#allocation8], %s55
      %s57 = sshll.u32 [#allocation7], 4
      %s58 = int_to_ptr.vmem [resolvable:$true] %s57
      %63 = dma.hbm_to_vmem [thread:$0]  %s3, 4096, %s58, [#allocation8], 128, 128, 8
    $region17: #{dueling_q_forward.1} parent=1 // pred_fallthru
      _
    // Predicated region
    $region18: #{dueling_q_forward.1} parent=1 // pred_check
      _
    $region19: #{dueling_q_forward.1} parent=1 // pred_check_branch
      %65 = sbr.rel (0) target = $region21
    $region20: #{dueling_q_forward.1} parent=1 // pred_region
      _
    $region21: #{dueling_q_forward.1} parent=1 // pred_fallthru
      _
    // Predicated region
    $region22: #{dueling_q_forward.1} parent=1 // pred_check
      _
    $region23: #{dueling_q_forward.1} parent=1 // pred_check_branch
      %67 = sbr.rel (0) target = $region25
    $region24: #{dueling_q_forward.1} parent=1 // pred_region
      %s69 = ssub.s32 4096, 4096
      %70 = vsyncadd [#allocation8], %s69
      %s71 = sshll.u32 [#allocation9], 4
      %s72 = int_to_ptr.vmem [resolvable:$true] %s71
      %77 = dma.hbm_to_vmem [thread:$0]  %s5, 4096, %s72, [#allocation8], 128, 128, 8
    $region25: #{dueling_q_forward.1} parent=1 // pred_fallthru
      _
    // Predicated region
    $region26: #{dueling_q_forward.1} parent=1 // pred_check
      _
    $region27: #{dueling_q_forward.1} parent=1 // pred_check_branch
      %79 = sbr.rel (0) target = $region29
    $region28: #{dueling_q_forward.1} parent=1 // pred_region
      _
    $region29: #{dueling_q_forward.1} parent=1 // pred_fallthru
      _
    // Predicated region
    $region30: #{dueling_q_forward.1} parent=1 // pred_check
      _
    $region31: #{dueling_q_forward.1} parent=1 // pred_check_branch
      %81 = sbr.rel (0) target = $region33
    $region32: #{dueling_q_forward.1} parent=1 // pred_region
      %s83 = ssub.s32 2048, 2048
      %84 = vsyncadd [#allocation11], %s83
      %s85 = sshll.u32 [#allocation10], 4
      %s86 = int_to_ptr.vmem [resolvable:$true] %s85
      %91 = dma.hbm_to_vmem [thread:$0]  %s7, 2048, %s86, [#allocation11], 64, 64, 4
    $region33: #{dueling_q_forward.1} parent=1 // pred_fallthru
      _
    // Predicated region
    $region34: #{dueling_q_forward.1} parent=1 // pred_check
      _
    $region35: #{dueling_q_forward.1} parent=1 // pred_check_branch
      %93 = sbr.rel (0) target = $region37
    $region36: #{dueling_q_forward.1} parent=1 // pred_region
      _
    $region37: #{dueling_q_forward.1} parent=1 // pred_fallthru
      _
    // Predicated region
    $region38: #{dueling_q_forward.1} parent=1 // pred_check
      _
    $region39: #{dueling_q_forward.1} parent=1 // pred_check_branch
      %95 = sbr.rel (0) target = $region41
    $region40: #{dueling_q_forward.1} parent=1 // pred_region
      %96 = dma.done [#allocation3], 1536
    $region41: #{dueling_q_forward.1} parent=1 // pred_fallthru
      _
    // Predicated region
    $region42: #{dueling_q_forward.1} parent=1 // pred_check
      _
    $region43: #{dueling_q_forward.1} parent=1 // pred_check_branch
      %98 = sbr.rel (0) target = $region45
    $region44: #{dueling_q_forward.1} parent=1 // pred_region
      %99 = dma.done [#allocation5], 2304
    $region45: #{dueling_q_forward.1} parent=1 // pred_fallthru
      _
    // Predicated region
    $region46: #{dueling_q_forward.1} parent=1 // pred_check
      _
    $region47: #{dueling_q_forward.1} parent=1 // pred_check_branch
      %101 = sbr.rel (0) target = $region49
    $region48: #{dueling_q_forward.1} parent=1 // pred_region
      %102 = dma.done [#allocation5], 32
    $region49: #{dueling_q_forward.1} parent=1 // pred_fallthru
      _
    // Predicated region
    $region50: #{dueling_q_forward.1} parent=1 // pred_check
      _
    $region51: #{dueling_q_forward.1} parent=1 // pred_check_branch
      %104 = sbr.rel (0) target = $region53
    $region52: #{dueling_q_forward.1} parent=1 // pred_region
      %105 = dma.done [#allocation8], 4096
    $region53: #{dueling_q_forward.1} parent=1 // pred_fallthru
      _
    // Predicated region
    $region54: #{dueling_q_forward.1} parent=1 // pred_check
      _
    $region55: #{dueling_q_forward.1} parent=1 // pred_check_branch
      %107 = sbr.rel (0) target = $region57
    $region56: #{dueling_q_forward.1} parent=1 // pred_region
      %108 = dma.done [#allocation8], 4096
    $region57: #{dueling_q_forward.1} parent=1 // pred_fallthru
      _
    // Predicated region
    $region58: #{dueling_q_forward.1} parent=1 // pred_check
      _
    $region59: #{dueling_q_forward.1} parent=1 // pred_check_branch
      %110 = sbr.rel (0) target = $region61
    $region60: #{dueling_q_forward.1} parent=1 // pred_region
      %111 = dma.done [#allocation11], 2048
    $region61: #{dueling_q_forward.1} parent=1 // pred_fallthru
      _
    %v113 = vld [vmem:[#allocation2] sm:$0xff]
    %v114 = vld [vmem:[#allocation2 + $0x8] sm:$0xff]
    %v115 = vld [vmem:[#allocation2 + $0x10] sm:$0xff]
    %v116 = vld [vmem:[#allocation2 + $0x18] sm:$0xff]
    %v117 = vld [vmem:[#allocation2 + $0x20] sm:$0xff]
    %v118 = vld [vmem:[#allocation2 + $0x28] sm:$0xff]
    %v119 = vld [vmem:[#allocation2 + $0x30] sm:$0xff]
    %v120 = vld [vmem:[#allocation2 + $0x38] sm:$0xff]
    %v121 = vld [vmem:[#allocation2 + $0x40] sm:$0xff]
    %v122 = vld [vmem:[#allocation2 + $0x48] sm:$0xff]
    %v123 = vld [vmem:[#allocation2 + $0x50] sm:$0xf]
    %v124 = vld [vmem:[#allocation2 + $0x58] sm:$0xf]
    %v125 = vpack.c.bf16 %v115, %v113
    %v126 = vpack.c.bf16 %v116, %v114
    %v127 = vpack.c.bf16 %v119, %v117
    %v128 = vpack.c.bf16 %v120, %v118
    %v129 = vpack.c.bf16 %v123, %v121
    %v130 = vpack.c.bf16 %v124, %v122
    %v131 = vld [vmem:[#allocation4] sm:$0xff]
    %v132 = vld [vmem:[#allocation4 + $0x8] sm:$0xff]
    %v133 = vld [vmem:[#allocation4 + $0x10] sm:$0xff]
    %v134 = vld [vmem:[#allocation4 + $0x18] sm:$0xff]
    %v135 = vld [vmem:[#allocation4 + $0x20] sm:$0xff]
    %v136 = vld [vmem:[#allocation4 + $0x28] sm:$0xff]
    %v137 = vld [vmem:[#allocation4 + $0x30] sm:$0xff]
    %v138 = vld [vmem:[#allocation4 + $0x38] sm:$0xff]
    %v139 = vld [vmem:[#allocation4 + $0x40] sm:$0xff]
    %v140 = vld [vmem:[#allocation4 + $0x48] sm:$0xff]
    %v141 = vld [vmem:[#allocation4 + $0x50] sm:$0xff]
    %v142 = vld [vmem:[#allocation4 + $0x58] sm:$0xff]
    %v143 = vld [vmem:[#allocation4 + $0x60] sm:$0xff]
    %v144 = vld [vmem:[#allocation4 + $0x68] sm:$0xff]
    %v145 = vld [vmem:[#allocation4 + $0x70] sm:$0xff]
    %v146 = vld [vmem:[#allocation4 + $0x78] sm:$0xff]
    %v147 = vld [vmem:[#allocation4 + $0x80] sm:$0xff]
    %v148 = vld [vmem:[#allocation4 + $0x88] sm:$0xff]
    %v149 = vld [vmem:[#allocation6] sm:$0x3]
    %v151 = vlaneseq
    %v152 = vshrl.u32 %v151, 7
    %v153 = vsub.s32 0, %v152
    %v154 = vrot.slane %v149, %v153
    %v155 = vlaneseq
    %v156 = vshrl.u32 %v155, 7
    %v157 = vsub.s32 1, %v156
    %v158 = vrot.slane %v149, %v157
    %v179 = vunpack.c.l.b16 %v131
    %v180 = vunpack.c.h.b16 %v131
    %v181 = vunpack.c.l.b16 %v132
    %v182 = vunpack.c.h.b16 %v132
    %v183 = vunpack.c.l.b16 %v133
    %v184 = vunpack.c.h.b16 %v133
    %v185 = vunpack.c.l.b16 %v134
    %v186 = vunpack.c.h.b16 %v134
    %v187 = vunpack.c.l.b16 %v135
    %v188 = vunpack.c.h.b16 %v135
    %v189 = vunpack.c.l.b16 %v136
    %v190 = vunpack.c.h.b16 %v136
    %v191 = vunpack.c.l.b16 %v137
    %v192 = vunpack.c.h.b16 %v137
    %v193 = vunpack.c.l.b16 %v138
    %v194 = vunpack.c.h.b16 %v138
    %v195 = vunpack.c.l.b16 %v139
    %v196 = vunpack.c.h.b16 %v139
    %v197 = vunpack.c.l.b16 %v140
    %v198 = vunpack.c.h.b16 %v140
    %v199 = vunpack.c.l.b16 %v141
    %v200 = vunpack.c.h.b16 %v141
    %v201 = vunpack.c.l.b16 %v142
    %v202 = vunpack.c.h.b16 %v142
    %v203 = vunpack.c.l.b16 %v143
    %v204 = vunpack.c.h.b16 %v143
    %v205 = vunpack.c.l.b16 %v144
    %v206 = vunpack.c.h.b16 %v144
    %v207 = vunpack.c.l.b16 %v145
    %v208 = vunpack.c.h.b16 %v145
    %v209 = vunpack.c.l.b16 %v146
    %v210 = vunpack.c.h.b16 %v146
    %v211 = vunpack.c.l.b16 %v147
    %v212 = vunpack.c.h.b16 %v147
    %v213 = vunpack.c.l.b16 %v148
    %v214 = vunpack.c.h.b16 %v148
    %v215 = vpack.c.b16 %v181, %v179
    %v216 = vpack.c.b16 %v182, %v180
    %v217 = vpack.c.b16 %v185, %v183
    %v218 = vpack.c.b16 %v186, %v184
    %v219 = vpack.c.b16 %v189, %v187
    %v220 = vpack.c.b16 %v190, %v188
    %v221 = vpack.c.b16 %v193, %v191
    %v222 = vpack.c.b16 %v194, %v192
    %v223 = vpack.c.b16 %v197, %v195
    %v224 = vpack.c.b16 %v198, %v196
    %v225 = vpack.c.b16 %v201, %v199
    %v226 = vpack.c.b16 %v202, %v200
    %v227 = vpack.c.b16 %v205, %v203
    %v228 = vpack.c.b16 %v206, %v204
    %v229 = vpack.c.b16 %v209, %v207
    %v230 = vpack.c.b16 %v210, %v208
    %v231 = vpack.c.b16 %v213, %v211
    %v232 = vpack.c.b16 %v214, %v212
    %vm251 = vcmask 130048
    %v253 = vsel %vm251, %v126, 0
    %v256 = vsel %vm251, %v128, 0
    %v259 = vsel %vm251, %v130, 0
    %261 = vmatprep.subr.bf16.mxu0 %v230
    %262 = vmatpush1.bf16.msra.mxu0 %v229
    %263 = vmatprep.subr.bf16.mxu0 %v228
    %264 = vmatpush1.bf16.msra.mxu0 %v227
    %265 = vmatprep.subr.bf16.mxu0 %v226
    %266 = vmatpush1.bf16.msra.mxu0 %v225
    %267 = vmatprep.subr.bf16.mxu0 %v224
    %268 = vmatpush1.bf16.msra.mxu0 %v223
    %269 = vmatprep.subr.bf16.mxu0 %v222
    %270 = vmatpush1.bf16.msra.mxu0 %v221
    %271 = vmatprep.subr.bf16.mxu0 %v220
    %272 = vmatpush1.bf16.msra.mxu0 %v219
    %273 = vmatprep.subr.bf16.mxu0 %v218
    %274 = vmatpush1.bf16.msra.mxu0 %v217
    %275 = vmatprep.subr.bf16.mxu0 %v216
    %276 = vmatpush1.bf16.msra.mxu0 %v215
    %277 = vmatprep.subr.bf16.mxu0 0
    %278 = vmatpush2.bf16.msra.mxu0 0
    %279 = vmatprep.subr.bf16.mxu0 0
    %280 = vmatpush2.bf16.msra.mxu0 0
    %281 = vmatprep.subr.bf16.mxu0 0
    %282 = vmatpush2.bf16.msra.mxu0 0
    %283 = vmatprep.subr.bf16.mxu0 0
    %284 = vmatpush2.bf16.msra.mxu0 0
    %285 = vmatprep.subr.bf16.mxu0 0
    %286 = vmatpush2.bf16.msra.mxu0 0
    %287 = vmatprep.subr.bf16.mxu0 0
    %288 = vmatpush2.bf16.msra.mxu0 0
    %289 = vmatprep.subr.bf16.mxu0 0
    %290 = vmatpush2.bf16.msra.mxu0 0
    %291 = vmatprep.subr.bf16.mxu0 %v232
    %292 = vmatpush2.bf16.msra.mxu0 %v231
    %293 = vmatprep.mubr.bf16.mxu0 %v253
    %294 = vmatmul.mubr.bf16.gmra.mxu0 %v125
    %v295 = vpop.f32.mrf.mxu0
    %v296 = vadd.f32 %v154, %v295
    %v297 = vpop.f32.mrf.mxu0
    %v298 = vadd.f32 %v158, %v297
    %v299 = vpop.f32.mrf.mxu0
    %v300 = vadd.f32 %v154, %v299
    %v301 = vpop.f32.mrf.mxu0
    %v302 = vadd.f32 %v158, %v301
    %303 = vmatprep.mubr.bf16.mxu0 %v256
    %304 = vmatmul.mubr.bf16.gmra.mxu0 %v127
    %v305 = vpop.f32.mrf.mxu0
    %v306 = vadd.f32 %v154, %v305
    %v307 = vpop.f32.mrf.mxu0
    %v308 = vadd.f32 %v158, %v307
    %v309 = vpop.f32.mrf.mxu0
    %v310 = vadd.f32 %v154, %v309
    %v311 = vpop.f32.mrf.mxu0
    %v312 = vadd.f32 %v158, %v311
    %313 = vmatprep.mubr.bf16.mxu0 %v259
    %314 = vmatmul.mubr.bf16.gmra.mxu0 %v129
    %v315 = vpop.f32.mrf.mxu0
    %v316 = vadd.f32 %v154, %v315
    %v317 = vpop.f32.mrf.mxu0
    %v318 = vadd.f32 %v158, %v317
    %v319 = vpop.f32.mrf.mxu0
    %v320 = vadd.f32 %v154, %v319
    %v321 = vpop.f32.mrf.mxu0
    %v322 = vadd.f32 %v158, %v321
    %323 = vdwg.mxu0
    %v324 = vmax.f32 %v296, 0.0
    %v325 = vmax.f32 %v298, 0.0
    %v326 = vmax.f32 %v300, 0.0
    %v327 = vmax.f32 %v302, 0.0
    %v328 = vmax.f32 %v306, 0.0
    %v329 = vmax.f32 %v308, 0.0
    %v330 = vmax.f32 %v310, 0.0
    %v331 = vmax.f32 %v312, 0.0
    %v332 = vmax.f32 %v316, 0.0
    %v333 = vmax.f32 %v318, 0.0
    %v334 = vmax.f32 %v320, 0.0
    %v335 = vmax.f32 %v322, 0.0
    %v336 = vpack.c.bf16 %v326, %v324
    %v337 = vpack.c.bf16 %v327, %v325
    %v338 = vpack.c.bf16 %v330, %v328
    %v339 = vpack.c.bf16 %v331, %v329
    %v340 = vpack.c.bf16 %v334, %v332
    %v341 = vpack.c.bf16 %v335, %v333
    %v342 = vld [vmem:[#allocation7] sm:$0xff]
    %v343 = vld [vmem:[#allocation7 + $0x8] sm:$0xff]
    %v344 = vld [vmem:[#allocation7 + $0x10] sm:$0xff]
    %v345 = vld [vmem:[#allocation7 + $0x18] sm:$0xff]
    %v346 = vld [vmem:[#allocation7 + $0x20] sm:$0xff]
    %v347 = vld [vmem:[#allocation7 + $0x28] sm:$0xff]
    %v348 = vld [vmem:[#allocation7 + $0x30] sm:$0xff]
    %v349 = vld [vmem:[#allocation7 + $0x38] sm:$0xff]
    %v350 = vld [vmem:[#allocation7 + $0x40] sm:$0xff]
    %v351 = vld [vmem:[#allocation7 + $0x48] sm:$0xff]
    %v352 = vld [vmem:[#allocation7 + $0x50] sm:$0xff]
    %v353 = vld [vmem:[#allocation7 + $0x58] sm:$0xff]
    %v354 = vld [vmem:[#allocation7 + $0x60] sm:$0xff]
    %v355 = vld [vmem:[#allocation7 + $0x68] sm:$0xff]
    %v356 = vld [vmem:[#allocation7 + $0x70] sm:$0xff]
    %v357 = vld [vmem:[#allocation7 + $0x78] sm:$0xff]
    %v358 = vld [vmem:[#allocation7 + $0x80] sm:$0xff]
    %v359 = vld [vmem:[#allocation7 + $0x88] sm:$0xff]
    %v360 = vld [vmem:[#allocation7 + $0x90] sm:$0xff]
    %v361 = vld [vmem:[#allocation7 + $0x98] sm:$0xff]
    %v362 = vld [vmem:[#allocation7 + $0xa0] sm:$0xff]
    %v363 = vld [vmem:[#allocation7 + $0xa8] sm:$0xff]
    %v364 = vld [vmem:[#allocation7 + $0xb0] sm:$0xff]
    %v365 = vld [vmem:[#allocation7 + $0xb8] sm:$0xff]
    %v366 = vld [vmem:[#allocation7 + $0xc0] sm:$0xff]
    %v367 = vld [vmem:[#allocation7 + $0xc8] sm:$0xff]
    %v368 = vld [vmem:[#allocation7 + $0xd0] sm:$0xff]
    %v369 = vld [vmem:[#allocation7 + $0xd8] sm:$0xff]
    %v370 = vld [vmem:[#allocation7 + $0xe0] sm:$0xff]
    %v371 = vld [vmem:[#allocation7 + $0xe8] sm:$0xff]
    %v372 = vld [vmem:[#allocation7 + $0xf0] sm:$0xff]
    %v373 = vld [vmem:[#allocation7 + $0xf8] sm:$0xff]
    %v374 = vld [vmem:[%s4] sm:$0x3]
    %v376 = vlaneseq
    %v377 = vshrl.u32 %v376, 7
    %v378 = vsub.s32 0, %v377
    %v379 = vrot.slane %v374, %v378
    %v380 = vlaneseq
    %v381 = vshrl.u32 %v380, 7
    %v382 = vsub.s32 1, %v381
    %v383 = vrot.slane %v374, %v382
    %v418 = vunpack.c.l.b16 %v342
    %v419 = vunpack.c.h.b16 %v342
    %v420 = vunpack.c.l.b16 %v343
    %v421 = vunpack.c.h.b16 %v343
    %v422 = vunpack.c.l.b16 %v344
    %v423 = vunpack.c.h.b16 %v344
    %v424 = vunpack.c.l.b16 %v345
    %v425 = vunpack.c.h.b16 %v345
    %v426 = vunpack.c.l.b16 %v346
    %v427 = vunpack.c.h.b16 %v346
    %v428 = vunpack.c.l.b16 %v347
    %v429 = vunpack.c.h.b16 %v347
    %v430 = vunpack.c.l.b16 %v348
    %v431 = vunpack.c.h.b16 %v348
    %v432 = vunpack.c.l.b16 %v349
    %v433 = vunpack.c.h.b16 %v349
    %v434 = vunpack.c.l.b16 %v350
    %v435 = vunpack.c.h.b16 %v350
    %v436 = vunpack.c.l.b16 %v351
    %v437 = vunpack.c.h.b16 %v351
    %v438 = vunpack.c.l.b16 %v352
    %v439 = vunpack.c.h.b16 %v352
    %v440 = vunpack.c.l.b16 %v353
    %v441 = vunpack.c.h.b16 %v353
    %v442 = vunpack.c.l.b16 %v354
    %v443 = vunpack.c.h.b16 %v354
    %v444 = vunpack.c.l.b16 %v355
    %v445 = vunpack.c.h.b16 %v355
    %v446 = vunpack.c.l.b16 %v356
    %v447 = vunpack.c.h.b16 %v356
    %v448 = vunpack.c.l.b16 %v357
    %v449 = vunpack.c.h.b16 %v357
    %v450 = vunpack.c.l.b16 %v358
    %v451 = vunpack.c.h.b16 %v358
    %v452 = vunpack.c.l.b16 %v359
    %v453 = vunpack.c.h.b16 %v359
    %v454 = vunpack.c.l.b16 %v360
    %v455 = vunpack.c.h.b16 %v360
    %v456 = vunpack.c.l.b16 %v361
    %v457 = vunpack.c.h.b16 %v361
    %v458 = vunpack.c.l.b16 %v362
    %v459 = vunpack.c.h.b16 %v362
    %v460 = vunpack.c.l.b16 %v363
    %v461 = vunpack.c.h.b16 %v363
    %v462 = vunpack.c.l.b16 %v364
    %v463 = vunpack.c.h.b16 %v364
    %v464 = vunpack.c.l.b16 %v365
    %v465 = vunpack.c.h.b16 %v365
    %v466 = vunpack.c.l.b16 %v366
    %v467 = vunpack.c.h.b16 %v366
    %v468 = vunpack.c.l.b16 %v367
    %v469 = vunpack.c.h.b16 %v367
    %v470 = vunpack.c.l.b16 %v368
    %v471 = vunpack.c.h.b16 %v368
    %v472 = vunpack.c.l.b16 %v369
    %v473 = vunpack.c.h.b16 %v369
    %v474 = vunpack.c.l.b16 %v370
    %v475 = vunpack.c.h.b16 %v370
    %v476 = vunpack.c.l.b16 %v371
    %v477 = vunpack.c.h.b16 %v371
    %v478 = vunpack.c.l.b16 %v372
    %v479 = vunpack.c.h.b16 %v372
    %v480 = vunpack.c.l.b16 %v373
    %v481 = vunpack.c.h.b16 %v373
    %v482 = vpack.c.b16 %v420, %v418
    %v483 = vpack.c.b16 %v421, %v419
    %v484 = vpack.c.b16 %v424, %v422
    %v485 = vpack.c.b16 %v425, %v423
    %v486 = vpack.c.b16 %v428, %v426
    %v487 = vpack.c.b16 %v429, %v427
    %v488 = vpack.c.b16 %v432, %v430
    %v489 = vpack.c.b16 %v433, %v431
    %v490 = vpack.c.b16 %v436, %v434
    %v491 = vpack.c.b16 %v437, %v435
    %v492 = vpack.c.b16 %v440, %v438
    %v493 = vpack.c.b16 %v441, %v439
    %v494 = vpack.c.b16 %v444, %v442
    %v495 = vpack.c.b16 %v445, %v443
    %v496 = vpack.c.b16 %v448, %v446
    %v497 = vpack.c.b16 %v449, %v447
    %v498 = vpack.c.b16 %v452, %v450
    %v499 = vpack.c.b16 %v453, %v451
    %v500 = vpack.c.b16 %v456, %v454
    %v501 = vpack.c.b16 %v457, %v455
    %v502 = vpack.c.b16 %v460, %v458
    %v503 = vpack.c.b16 %v461, %v459
    %v504 = vpack.c.b16 %v464, %v462
    %v505 = vpack.c.b16 %v465, %v463
    %v506 = vpack.c.b16 %v468, %v466
    %v507 = vpack.c.b16 %v469, %v467
    %v508 = vpack.c.b16 %v472, %v470
    %v509 = vpack.c.b16 %v473, %v471
    %v510 = vpack.c.b16 %v476, %v474
    %v511 = vpack.c.b16 %v477, %v475
    %v512 = vpack.c.b16 %v480, %v478
    %v513 = vpack.c.b16 %v481, %v479
    %546 = vmatprep.subr.bf16.mxu0 %v497
    %547 = vmatpush1.bf16.msra.mxu0 %v496
    %548 = vmatprep.subr.bf16.mxu0 %v495
    %549 = vmatpush1.bf16.msra.mxu0 %v494
    %550 = vmatprep.subr.bf16.mxu0 %v493
    %551 = vmatpush1.bf16.msra.mxu0 %v492
    %552 = vmatprep.subr.bf16.mxu0 %v491
    %553 = vmatpush1.bf16.msra.mxu0 %v490
    %554 = vmatprep.subr.bf16.mxu0 %v489
    %555 = vmatpush1.bf16.msra.mxu0 %v488
    %556 = vmatprep.subr.bf16.mxu0 %v487
    %557 = vmatpush1.bf16.msra.mxu0 %v486
    %558 = vmatprep.subr.bf16.mxu0 %v485
    %559 = vmatpush1.bf16.msra.mxu0 %v484
    %560 = vmatprep.subr.bf16.mxu0 %v483
    %561 = vmatpush1.bf16.msra.mxu0 %v482
    %562 = vmatprep.subr.bf16.mxu0 %v513
    %563 = vmatpush2.bf16.msra.mxu0 %v512
    %564 = vmatprep.subr.bf16.mxu0 %v511
    %565 = vmatpush2.bf16.msra.mxu0 %v510
    %566 = vmatprep.subr.bf16.mxu0 %v509
    %567 = vmatpush2.bf16.msra.mxu0 %v508
    %568 = vmatprep.subr.bf16.mxu0 %v507
    %569 = vmatpush2.bf16.msra.mxu0 %v506
    %570 = vmatprep.subr.bf16.mxu0 %v505
    %571 = vmatpush2.bf16.msra.mxu0 %v504
    %572 = vmatprep.subr.bf16.mxu0 %v503
    %573 = vmatpush2.bf16.msra.mxu0 %v502
    %574 = vmatprep.subr.bf16.mxu0 %v501
    %575 = vmatpush2.bf16.msra.mxu0 %v500
    %576 = vmatprep.subr.bf16.mxu0 %v499
    %577 = vmatpush2.bf16.msra.mxu0 %v498
    %578 = vmatprep.mubr.bf16.mxu0 %v337
    %579 = vmatmul.mubr.bf16.gmra.mxu0 %v336
    %v580 = vpop.f32.mrf.mxu0
    %v581 = vadd.f32 %v379, %v580
    %v582 = vpop.f32.mrf.mxu0
    %v583 = vadd.f32 %v383, %v582
    %v584 = vpop.f32.mrf.mxu0
    %v585 = vadd.f32 %v379, %v584
    %v586 = vpop.f32.mrf.mxu0
    %v587 = vadd.f32 %v383, %v586
    %588 = vmatprep.mubr.bf16.mxu0 %v339
    %589 = vmatmul.mubr.bf16.gmra.mxu0 %v338
    %v590 = vpop.f32.mrf.mxu0
    %v591 = vadd.f32 %v379, %v590
    %v592 = vpop.f32.mrf.mxu0
    %v593 = vadd.f32 %v383, %v592
    %v594 = vpop.f32.mrf.mxu0
    %v595 = vadd.f32 %v379, %v594
    %v596 = vpop.f32.mrf.mxu0
    %v597 = vadd.f32 %v383, %v596
    %598 = vmatprep.mubr.bf16.mxu0 %v341
    %599 = vmatmul.mubr.bf16.gmra.mxu0 %v340
    %v600 = vpop.f32.mrf.mxu0
    %v601 = vadd.f32 %v379, %v600
    %v602 = vpop.f32.mrf.mxu0
    %v603 = vadd.f32 %v383, %v602
    %v604 = vpop.f32.mrf.mxu0
    %v605 = vadd.f32 %v379, %v604
    %v606 = vpop.f32.mrf.mxu0
    %v607 = vadd.f32 %v383, %v606
    %608 = vdwg.mxu0
    %v609 = vmax.f32 %v581, 0.0
    %v610 = vmax.f32 %v583, 0.0
    %v611 = vmax.f32 %v585, 0.0
    %v612 = vmax.f32 %v587, 0.0
    %v613 = vmax.f32 %v591, 0.0
    %v614 = vmax.f32 %v593, 0.0
    %v615 = vmax.f32 %v595, 0.0
    %v616 = vmax.f32 %v597, 0.0
    %v617 = vmax.f32 %v601, 0.0
    %v618 = vmax.f32 %v603, 0.0
    %v619 = vmax.f32 %v605, 0.0
    %v620 = vmax.f32 %v607, 0.0
    %v621 = vpack.c.bf16 %v611, %v609
    %v622 = vpack.c.bf16 %v612, %v610
    %v623 = vpack.c.bf16 %v615, %v613
    %v624 = vpack.c.bf16 %v616, %v614
    %v625 = vpack.c.bf16 %v619, %v617
    %v626 = vpack.c.bf16 %v620, %v618
    %v627 = vld [vmem:[#allocation9] sm:$0xff]
    %v628 = vld [vmem:[#allocation9 + $0x8] sm:$0xff]
    %v629 = vld [vmem:[#allocation9 + $0x10] sm:$0xff]
    %v630 = vld [vmem:[#allocation9 + $0x18] sm:$0xff]
    %v631 = vld [vmem:[#allocation9 + $0x20] sm:$0xff]
    %v632 = vld [vmem:[#allocation9 + $0x28] sm:$0xff]
    %v633 = vld [vmem:[#allocation9 + $0x30] sm:$0xff]
    %v634 = vld [vmem:[#allocation9 + $0x38] sm:$0xff]
    %v635 = vld [vmem:[#allocation9 + $0x40] sm:$0xff]
    %v636 = vld [vmem:[#allocation9 + $0x48] sm:$0xff]
    %v637 = vld [vmem:[#allocation9 + $0x50] sm:$0xff]
    %v638 = vld [vmem:[#allocation9 + $0x58] sm:$0xff]
    %v639 = vld [vmem:[#allocation9 + $0x60] sm:$0xff]
    %v640 = vld [vmem:[#allocation9 + $0x68] sm:$0xff]
    %v641 = vld [vmem:[#allocation9 + $0x70] sm:$0xff]
    %v642 = vld [vmem:[#allocation9 + $0x78] sm:$0xff]
    %v643 = vld [vmem:[#allocation9 + $0x80] sm:$0xff]
    %v644 = vld [vmem:[#allocation9 + $0x88] sm:$0xff]
    %v645 = vld [vmem:[#allocation9 + $0x90] sm:$0xff]
    %v646 = vld [vmem:[#allocation9 + $0x98] sm:$0xff]
    %v647 = vld [vmem:[#allocation9 + $0xa0] sm:$0xff]
    %v648 = vld [vmem:[#allocation9 + $0xa8] sm:$0xff]
    %v649 = vld [vmem:[#allocation9 + $0xb0] sm:$0xff]
    %v650 = vld [vmem:[#allocation9 + $0xb8] sm:$0xff]
    %v651 = vld [vmem:[#allocation9 + $0xc0] sm:$0xff]
    %v652 = vld [vmem:[#allocation9 + $0xc8] sm:$0xff]
    %v653 = vld [vmem:[#allocation9 + $0xd0] sm:$0xff]
    %v654 = vld [vmem:[#allocation9 + $0xd8] sm:$0xff]
    %v655 = vld [vmem:[#allocation9 + $0xe0] sm:$0xff]
    %v656 = vld [vmem:[#allocation9 + $0xe8] sm:$0xff]
    %v657 = vld [vmem:[#allocation9 + $0xf0] sm:$0xff]
    %v658 = vld [vmem:[#allocation9 + $0xf8] sm:$0xff]
    %v659 = vld [vmem:[%s6] sm:$0x3]
    %v661 = vlaneseq
    %v662 = vshrl.u32 %v661, 7
    %v663 = vsub.s32 0, %v662
    %v664 = vrot.slane %v659, %v663
    %v665 = vlaneseq
    %v666 = vshrl.u32 %v665, 7
    %v667 = vsub.s32 1, %v666
    %v668 = vrot.slane %v659, %v667
    %v703 = vunpack.c.l.b16 %v627
    %v704 = vunpack.c.h.b16 %v627
    %v705 = vunpack.c.l.b16 %v628
    %v706 = vunpack.c.h.b16 %v628
    %v707 = vunpack.c.l.b16 %v629
    %v708 = vunpack.c.h.b16 %v629
    %v709 = vunpack.c.l.b16 %v630
    %v710 = vunpack.c.h.b16 %v630
    %v711 = vunpack.c.l.b16 %v631
    %v712 = vunpack.c.h.b16 %v631
    %v713 = vunpack.c.l.b16 %v632
    %v714 = vunpack.c.h.b16 %v632
    %v715 = vunpack.c.l.b16 %v633
    %v716 = vunpack.c.h.b16 %v633
    %v717 = vunpack.c.l.b16 %v634
    %v718 = vunpack.c.h.b16 %v634
    %v719 = vunpack.c.l.b16 %v635
    %v720 = vunpack.c.h.b16 %v635
    %v721 = vunpack.c.l.b16 %v636
    %v722 = vunpack.c.h.b16 %v636
    %v723 = vunpack.c.l.b16 %v637
    %v724 = vunpack.c.h.b16 %v637
    %v725 = vunpack.c.l.b16 %v638
    %v726 = vunpack.c.h.b16 %v638
    %v727 = vunpack.c.l.b16 %v639
    %v728 = vunpack.c.h.b16 %v639
    %v729 = vunpack.c.l.b16 %v640
    %v730 = vunpack.c.h.b16 %v640
    %v731 = vunpack.c.l.b16 %v641
    %v732 = vunpack.c.h.b16 %v641
    %v733 = vunpack.c.l.b16 %v642
    %v734 = vunpack.c.h.b16 %v642
    %v735 = vunpack.c.l.b16 %v643
    %v736 = vunpack.c.h.b16 %v643
    %v737 = vunpack.c.l.b16 %v644
    %v738 = vunpack.c.h.b16 %v644
    %v739 = vunpack.c.l.b16 %v645
    %v740 = vunpack.c.h.b16 %v645
    %v741 = vunpack.c.l.b16 %v646
    %v742 = vunpack.c.h.b16 %v646
    %v743 = vunpack.c.l.b16 %v647
    %v744 = vunpack.c.h.b16 %v647
    %v745 = vunpack.c.l.b16 %v648
    %v746 = vunpack.c.h.b16 %v648
    %v747 = vunpack.c.l.b16 %v649
    %v748 = vunpack.c.h.b16 %v649
    %v749 = vunpack.c.l.b16 %v650
    %v750 = vunpack.c.h.b16 %v650
    %v751 = vunpack.c.l.b16 %v651
    %v752 = vunpack.c.h.b16 %v651
    %v753 = vunpack.c.l.b16 %v652
    %v754 = vunpack.c.h.b16 %v652
    %v755 = vunpack.c.l.b16 %v653
    %v756 = vunpack.c.h.b16 %v653
    %v757 = vunpack.c.l.b16 %v654
    %v758 = vunpack.c.h.b16 %v654
    %v759 = vunpack.c.l.b16 %v655
    %v760 = vunpack.c.h.b16 %v655
    %v761 = vunpack.c.l.b16 %v656
    %v762 = vunpack.c.h.b16 %v656
    %v763 = vunpack.c.l.b16 %v657
    %v764 = vunpack.c.h.b16 %v657
    %v765 = vunpack.c.l.b16 %v658
    %v766 = vunpack.c.h.b16 %v658
    %v767 = vpack.c.b16 %v705, %v703
    %v768 = vpack.c.b16 %v706, %v704
    %v769 = vpack.c.b16 %v709, %v707
    %v770 = vpack.c.b16 %v710, %v708
    %v771 = vpack.c.b16 %v713, %v711
    %v772 = vpack.c.b16 %v714, %v712
    %v773 = vpack.c.b16 %v717, %v715
    %v774 = vpack.c.b16 %v718, %v716
    %v775 = vpack.c.b16 %v721, %v719
    %v776 = vpack.c.b16 %v722, %v720
    %v777 = vpack.c.b16 %v725, %v723
    %v778 = vpack.c.b16 %v726, %v724
    %v779 = vpack.c.b16 %v729, %v727
    %v780 = vpack.c.b16 %v730, %v728
    %v781 = vpack.c.b16 %v733, %v731
    %v782 = vpack.c.b16 %v734, %v732
    %v783 = vpack.c.b16 %v737, %v735
    %v784 = vpack.c.b16 %v738, %v736
    %v785 = vpack.c.b16 %v741, %v739
    %v786 = vpack.c.b16 %v742, %v740
    %v787 = vpack.c.b16 %v745, %v743
    %v788 = vpack.c.b16 %v746, %v744
    %v789 = vpack.c.b16 %v749, %v747
    %v790 = vpack.c.b16 %v750, %v748
    %v791 = vpack.c.b16 %v753, %v751
    %v792 = vpack.c.b16 %v754, %v752
    %v793 = vpack.c.b16 %v757, %v755
    %v794 = vpack.c.b16 %v758, %v756
    %v795 = vpack.c.b16 %v761, %v759
    %v796 = vpack.c.b16 %v762, %v760
    %v797 = vpack.c.b16 %v765, %v763
    %v798 = vpack.c.b16 %v766, %v764
    %831 = vmatprep.subr.bf16.mxu0 %v782
    %832 = vmatpush1.bf16.msra.mxu0 %v781
    %833 = vmatprep.subr.bf16.mxu0 %v780
    %834 = vmatpush1.bf16.msra.mxu0 %v779
    %835 = vmatprep.subr.bf16.mxu0 %v778
    %836 = vmatpush1.bf16.msra.mxu0 %v777
    %837 = vmatprep.subr.bf16.mxu0 %v776
    %838 = vmatpush1.bf16.msra.mxu0 %v775
    %839 = vmatprep.subr.bf16.mxu0 %v774
    %840 = vmatpush1.bf16.msra.mxu0 %v773
    %841 = vmatprep.subr.bf16.mxu0 %v772
    %842 = vmatpush1.bf16.msra.mxu0 %v771
    %843 = vmatprep.subr.bf16.mxu0 %v770
    %844 = vmatpush1.bf16.msra.mxu0 %v769
    %845 = vmatprep.subr.bf16.mxu0 %v768
    %846 = vmatpush1.bf16.msra.mxu0 %v767
    %847 = vmatprep.subr.bf16.mxu0 %v798
    %848 = vmatpush2.bf16.msra.mxu0 %v797
    %849 = vmatprep.subr.bf16.mxu0 %v796
    %850 = vmatpush2.bf16.msra.mxu0 %v795
    %851 = vmatprep.subr.bf16.mxu0 %v794
    %852 = vmatpush2.bf16.msra.mxu0 %v793
    %853 = vmatprep.subr.bf16.mxu0 %v792
    %854 = vmatpush2.bf16.msra.mxu0 %v791
    %855 = vmatprep.subr.bf16.mxu0 %v790
    %856 = vmatpush2.bf16.msra.mxu0 %v789
    %857 = vmatprep.subr.bf16.mxu0 %v788
    %858 = vmatpush2.bf16.msra.mxu0 %v787
    %859 = vmatprep.subr.bf16.mxu0 %v786
    %860 = vmatpush2.bf16.msra.mxu0 %v785
    %861 = vmatprep.subr.bf16.mxu0 %v784
    %862 = vmatpush2.bf16.msra.mxu0 %v783
    %863 = vmatprep.mubr.bf16.mxu0 %v622
    %864 = vmatmul.mubr.bf16.gmra.mxu0 %v621
    %v865 = vpop.f32.mrf.mxu0
    %v866 = vadd.f32 %v664, %v865
    %v867 = vpop.f32.mrf.mxu0
    %v868 = vadd.f32 %v668, %v867
    %v869 = vpop.f32.mrf.mxu0
    %v870 = vadd.f32 %v664, %v869
    %v871 = vpop.f32.mrf.mxu0
    %v872 = vadd.f32 %v668, %v871
    %873 = vmatprep.mubr.bf16.mxu0 %v624
    %874 = vmatmul.mubr.bf16.gmra.mxu0 %v623
    %v875 = vpop.f32.mrf.mxu0
    %v876 = vadd.f32 %v664, %v875
    %v877 = vpop.f32.mrf.mxu0
    %v878 = vadd.f32 %v668, %v877
    %v879 = vpop.f32.mrf.mxu0
    %v880 = vadd.f32 %v664, %v879
    %v881 = vpop.f32.mrf.mxu0
    %v882 = vadd.f32 %v668, %v881
    %883 = vmatprep.mubr.bf16.mxu0 %v626
    %884 = vmatmul.mubr.bf16.gmra.mxu0 %v625
    %v885 = vpop.f32.mrf.mxu0
    %v886 = vadd.f32 %v664, %v885
    %v887 = vpop.f32.mrf.mxu0
    %v888 = vadd.f32 %v668, %v887
    %v889 = vpop.f32.mrf.mxu0
    %v890 = vadd.f32 %v664, %v889
    %v891 = vpop.f32.mrf.mxu0
    %v892 = vadd.f32 %v668, %v891
    %893 = vdwg.mxu0
    %v894 = vmax.f32 %v866, 0.0
    %v895 = vmax.f32 %v868, 0.0
    %v896 = vmax.f32 %v870, 0.0
    %v897 = vmax.f32 %v872, 0.0
    %v898 = vmax.f32 %v876, 0.0
    %v899 = vmax.f32 %v878, 0.0
    %v900 = vmax.f32 %v880, 0.0
    %v901 = vmax.f32 %v882, 0.0
    %v902 = vmax.f32 %v886, 0.0
    %v903 = vmax.f32 %v888, 0.0
    %v904 = vmax.f32 %v890, 0.0
    %v905 = vmax.f32 %v892, 0.0
    %v906 = vpack.c.bf16 %v896, %v894
    %v907 = vpack.c.bf16 %v897, %v895
    %v908 = vpack.c.bf16 %v900, %v898
    %v909 = vpack.c.bf16 %v901, %v899
    %v910 = vpack.c.bf16 %v904, %v902
    %v911 = vpack.c.bf16 %v905, %v903
    %v912 = vld [vmem:[#allocation10] sm:$0xf]
    %v913 = vld [vmem:[#allocation10 + $0x4] sm:$0xf]
    %v914 = vld [vmem:[#allocation10 + $0x8] sm:$0xf]
    %v915 = vld [vmem:[#allocation10 + $0xc] sm:$0xf]
    %v916 = vld [vmem:[#allocation10 + $0x10] sm:$0xf]
    %v917 = vld [vmem:[#allocation10 + $0x14] sm:$0xf]
    %v918 = vld [vmem:[#allocation10 + $0x18] sm:$0xf]
    %v919 = vld [vmem:[#allocation10 + $0x1c] sm:$0xf]
    %v920 = vld [vmem:[#allocation10 + $0x20] sm:$0xf]
    %v921 = vld [vmem:[#allocation10 + $0x24] sm:$0xf]
    %v922 = vld [vmem:[#allocation10 + $0x28] sm:$0xf]
    %v923 = vld [vmem:[#allocation10 + $0x2c] sm:$0xf]
    %v924 = vld [vmem:[#allocation10 + $0x30] sm:$0xf]
    %v925 = vld [vmem:[#allocation10 + $0x34] sm:$0xf]
    %v926 = vld [vmem:[#allocation10 + $0x38] sm:$0xf]
    %v927 = vld [vmem:[#allocation10 + $0x3c] sm:$0xf]
    %v928 = vld [vmem:[#allocation10 + $0x40] sm:$0xf]
    %v929 = vld [vmem:[#allocation10 + $0x44] sm:$0xf]
    %v930 = vld [vmem:[#allocation10 + $0x48] sm:$0xf]
    %v931 = vld [vmem:[#allocation10 + $0x4c] sm:$0xf]
    %v932 = vld [vmem:[#allocation10 + $0x50] sm:$0xf]
    %v933 = vld [vmem:[#allocation10 + $0x54] sm:$0xf]
    %v934 = vld [vmem:[#allocation10 + $0x58] sm:$0xf]
    %v935 = vld [vmem:[#allocation10 + $0x5c] sm:$0xf]
    %v936 = vld [vmem:[#allocation10 + $0x60] sm:$0xf]
    %v937 = vld [vmem:[#allocation10 + $0x64] sm:$0xf]
    %v938 = vld [vmem:[#allocation10 + $0x68] sm:$0xf]
    %v939 = vld [vmem:[#allocation10 + $0x6c] sm:$0xf]
    %v940 = vld [vmem:[#allocation10 + $0x70] sm:$0xf]
    %v941 = vld [vmem:[#allocation10 + $0x74] sm:$0xf]
    %v942 = vld [vmem:[#allocation10 + $0x78] sm:$0xf]
    %v943 = vld [vmem:[#allocation10 + $0x7c] sm:$0xf]
    %v944 = vld [vmem:[%s8] sm:$0x1]
    %v946 = vlaneseq
    %v947 = vshrl.u32 %v946, 7
    %v948 = vsub.s32 0, %v947
    %v949 = vrot.slane %v944, %v948
    %v983 = vunpack.c.l.b16 %v912
    %v984 = vunpack.c.l.b16 %v913
    %v985 = vunpack.c.l.b16 %v914
    %v986 = vunpack.c.l.b16 %v915
    %v987 = vunpack.c.l.b16 %v916
    %v988 = vunpack.c.l.b16 %v917
    %v989 = vunpack.c.l.b16 %v918
    %v990 = vunpack.c.l.b16 %v919
    %v991 = vunpack.c.l.b16 %v920
    %v992 = vunpack.c.l.b16 %v921
    %v993 = vunpack.c.l.b16 %v922
    %v994 = vunpack.c.l.b16 %v923
    %v995 = vunpack.c.l.b16 %v924
    %v996 = vunpack.c.l.b16 %v925
    %v997 = vunpack.c.l.b16 %v926
    %v998 = vunpack.c.l.b16 %v927
    %v999 = vunpack.c.l.b16 %v928
    %v1000 = vunpack.c.l.b16 %v929
    %v1001 = vunpack.c.l.b16 %v930
    %v1002 = vunpack.c.l.b16 %v931
    %v1003 = vunpack.c.l.b16 %v932
    %v1004 = vunpack.c.l.b16 %v933
    %v1005 = vunpack.c.l.b16 %v934
    %v1006 = vunpack.c.l.b16 %v935
    %v1007 = vunpack.c.l.b16 %v936
    %v1008 = vunpack.c.l.b16 %v937
    %v1009 = vunpack.c.l.b16 %v938
    %v1010 = vunpack.c.l.b16 %v939
    %v1011 = vunpack.c.l.b16 %v940
    %v1012 = vunpack.c.l.b16 %v941
    %v1013 = vunpack.c.l.b16 %v942
    %v1014 = vunpack.c.l.b16 %v943
    %v1015 = vpack.c.b16 %v984, %v983
    %v1016 = vpack.c.b16 %v986, %v985
    %v1017 = vpack.c.b16 %v988, %v987
    %v1018 = vpack.c.b16 %v990, %v989
    %v1019 = vpack.c.b16 %v992, %v991
    %v1020 = vpack.c.b16 %v994, %v993
    %v1021 = vpack.c.b16 %v996, %v995
    %v1022 = vpack.c.b16 %v998, %v997
    %v1023 = vpack.c.b16 %v1000, %v999
    %v1024 = vpack.c.b16 %v1002, %v1001
    %v1025 = vpack.c.b16 %v1004, %v1003
    %v1026 = vpack.c.b16 %v1006, %v1005
    %v1027 = vpack.c.b16 %v1008, %v1007
    %v1028 = vpack.c.b16 %v1010, %v1009
    %v1029 = vpack.c.b16 %v1012, %v1011
    %v1030 = vpack.c.b16 %v1014, %v1013
    %1047 = vmatprep.subr.bf16.mxu0 0
    %1048 = vmatpush1.bf16.msra.mxu0 %v1022
    %1049 = vmatprep.subr.bf16.mxu0 0
    %1050 = vmatpush1.bf16.msra.mxu0 %v1021
    %1051 = vmatprep.subr.bf16.mxu0 0
    %1052 = vmatpush1.bf16.msra.mxu0 %v1020
    %1053 = vmatprep.subr.bf16.mxu0 0
    %1054 = vmatpush1.bf16.msra.mxu0 %v1019
    %1055 = vmatprep.subr.bf16.mxu0 0
    %1056 = vmatpush1.bf16.msra.mxu0 %v1018
    %1057 = vmatprep.subr.bf16.mxu0 0
    %1058 = vmatpush1.bf16.msra.mxu0 %v1017
    %1059 = vmatprep.subr.bf16.mxu0 0
    %1060 = vmatpush1.bf16.msra.mxu0 %v1016
    %1061 = vmatprep.subr.bf16.mxu0 0
    %1062 = vmatpush1.bf16.msra.mxu0 %v1015
    %1063 = vmatprep.subr.bf16.mxu0 0
    %1064 = vmatpush2.bf16.msra.mxu0 %v1030
    %1065 = vmatprep.subr.bf16.mxu0 0
    %1066 = vmatpush2.bf16.msra.mxu0 %v1029
    %1067 = vmatprep.subr.bf16.mxu0 0
    %1068 = vmatpush2.bf16.msra.mxu0 %v1028
    %1069 = vmatprep.subr.bf16.mxu0 0
    %1070 = vmatpush2.bf16.msra.mxu0 %v1027
    %1071 = vmatprep.subr.bf16.mxu0 0
    %1072 = vmatpush2.bf16.msra.mxu0 %v1026
    %1073 = vmatprep.subr.bf16.mxu0 0
    %1074 = vmatpush2.bf16.msra.mxu0 %v1025
    %1075 = vmatprep.subr.bf16.mxu0 0
    %1076 = vmatpush2.bf16.msra.mxu0 %v1024
    %1077 = vmatprep.subr.bf16.mxu0 0
    %1078 = vmatpush2.bf16.msra.mxu0 %v1023
    %1079 = vmatprep.mubr.bf16.mxu0 %v907
    %1080 = vmatmul.mubr.bf16.gmra.mxu0 %v906
    %v1081 = vpop.f32.mrf.mxu0
    %v1082 = vadd.f32 %v949, %v1081
    %v1083 = vpop.f32.mrf.mxu0
    %v1084 = vpop.f32.mrf.mxu0
    %v1085 = vadd.f32 %v949, %v1084
    %v1086 = vpop.f32.mrf.mxu0
    %1087 = vmatprep.mubr.bf16.mxu0 %v909
    %1088 = vmatmul.mubr.bf16.gmra.mxu0 %v908
    %v1089 = vpop.f32.mrf.mxu0
    %v1090 = vadd.f32 %v949, %v1089
    %v1091 = vpop.f32.mrf.mxu0
    %v1092 = vpop.f32.mrf.mxu0
    %v1093 = vadd.f32 %v949, %v1092
    %v1094 = vpop.f32.mrf.mxu0
    %1095 = vmatprep.mubr.bf16.mxu0 %v911
    %1096 = vmatmul.mubr.bf16.gmra.mxu0 %v910
    %v1097 = vpop.f32.mrf.mxu0
    %v1098 = vadd.f32 %v949, %v1097
    %v1099 = vpop.f32.mrf.mxu0
    %v1100 = vpop.f32.mrf.mxu0
    %v1101 = vadd.f32 %v949, %v1100
    %v1102 = vpop.f32.mrf.mxu0
    %1103 = vdwg.mxu0
    %v1104 = vadd.f32 %v1082, %v1085
    %v1105 = vadd.f32 %v1104, %v1090
    %v1106 = vadd.f32 %v1105, %v1093
    %v1107 = vadd.f32 %v1106, %v1098
    %vm1108 = vcmask 1043456
    %v1109 = vsel %vm1108, %v1101, 0.0
    %v1110 = vadd.f32 %v1107, %v1109
    %1111 = vadd.xlane.f32.xlu0 %v1110
    %v1112 = vpop.xlane.xlu0 %1111
    %v1113 = vrot.slane %v1112, 4
    %v1114 = vadd.f32 %v1112, %v1113
    %v1115 = vrot.slane %v1114, 2
    %v1116 = vadd.f32 %v1114, %v1115
    %v1117 = vrot.slane %v1116, 1
    %v1118 = vadd.f32 %v1116, %v1117
    %s1119 = vtos %v1118
    %1126 = vrot.lane.b32.xlu0 %v1082, 88
    %v1127 = vpop.permute.xlu0 %1126
    %1128 = vrot.lane.b32.xlu0 %v1085, 88
    %v1129 = vpop.permute.xlu0 %1128
    %1130 = vrot.lane.b32.xlu0 %v1090, 88
    %v1131 = vpop.permute.xlu0 %1130
    %1132 = vrot.lane.b32.xlu0 %v1093, 88
    %v1133 = vpop.permute.xlu0 %1132
    %1134 = vrot.lane.b32.xlu0 %v1098, 88
    %v1135 = vpop.permute.xlu0 %1134
    %1136 = vrot.lane.b32.xlu0 %v1101, 88
    %v1137 = vpop.permute.xlu0 %1136
    %vm1144 = vcmask 7168
    %v1145 = vsel %vm1144, %v1127, 0.0
    %v1146 = vsel %vm1144, %v1129, 0.0
    %v1147 = vadd.f32 %v1145, %v1146
    %v1148 = vsel %vm1144, %v1131, 0.0
    %v1149 = vadd.f32 %v1147, %v1148
    %v1150 = vsel %vm1144, %v1133, 0.0
    %v1151 = vadd.f32 %v1149, %v1150
    %v1152 = vsel %vm1144, %v1135, 0.0
    %v1153 = vadd.f32 %v1151, %v1152
    %vm1154 = vcmask 3072
    %v1155 = vsel %vm1154, %v1137, 0.0
    %v1156 = vadd.f32 %v1153, %v1155
    %1157 = vadd.xlane.f32.xlu0 %v1156
    %v1158 = vpop.xlane.xlu0 %1157
    %v1159 = vrot.slane %v1158, 4
    %v1160 = vadd.f32 %v1158, %v1159
    %v1161 = vrot.slane %v1160, 2
    %v1162 = vadd.f32 %v1160, %v1161
    %v1163 = vrot.slane %v1162, 1
    %v1164 = vadd.f32 %v1162, %v1163
    %s1165 = vtos %v1164
    %s1166 = ssub.f32 %s1119, %s1165
    %s1167 = smul.f32 %s1166, 0.0005681818
    %1168 = vset.pattern.permute.xlu0 40
    %1169 = vperm.xlu0 %1168, %v1082
    %v1170 = vpop.permute.xlu0 %1169
    %1172 = vset.pattern.permute.xlu0 40
    %1173 = vperm.xlu0 %1172, %v1085
    %v1174 = vpop.permute.xlu0 %1173
    %1176 = vset.pattern.permute.xlu0 40
    %1177 = vperm.xlu0 %1176, %v1090
    %v1178 = vpop.permute.xlu0 %1177
    %1180 = vset.pattern.permute.xlu0 40
    %1181 = vperm.xlu0 %1180, %v1093
    %v1182 = vpop.permute.xlu0 %1181
    %1184 = vset.pattern.permute.xlu0 40
    %1185 = vperm.xlu0 %1184, %v1098
    %v1186 = vpop.permute.xlu0 %1185
    %1188 = vset.pattern.permute.xlu0 40
    %1189 = vperm.xlu0 %1188, %v1101
    %v1190 = vpop.permute.xlu0 %1189
    %v1192 = vadd.f32 %v1082, %v1170
    %v1193 = vadd.f32 %v1085, %v1174
    %v1194 = vadd.f32 %v1090, %v1178
    %v1195 = vadd.f32 %v1093, %v1182
    %v1196 = vadd.f32 %v1098, %v1186
    %v1197 = vadd.f32 %v1101, %v1190
    %v1198 = vstv %s1167
    %v1199 = vsub.f32 %v1192, %v1198
    %v1200 = vsub.f32 %v1193, %v1198
    %v1201 = vsub.f32 %v1194, %v1198
    %v1202 = vsub.f32 %v1195, %v1198
    %v1203 = vsub.f32 %v1196, %v1198
    %v1204 = vsub.f32 %v1197, %v1198
    %1205 = vst [vmem:[%s9] sm:$0xff] %v1199
    %1206 = vst [vmem:[%s9 + $0x8] sm:$0xff] %v1200
    %1207 = vst [vmem:[%s9 + $0x10] sm:$0xff] %v1201
    %1208 = vst [vmem:[%s9 + $0x18] sm:$0xff] %v1202
    %1209 = vst [vmem:[%s9 + $0x20] sm:$0xff] %v1203
    %1210 = vst [vmem:[%s9 + $0x28] sm:$0xf] %v1204
    // Predicated region
    $region62: #{dueling_q_forward.1} parent=1 // pred_check
      _
    $region63: #{dueling_q_forward.1} parent=1 // pred_check_branch
      %1212 = sbr.rel (0) target = $region65
    $region64: #{dueling_q_forward.1} parent=1 // pred_region
      _
    $region65: #{dueling_q_forward.1} parent=1 // pred_fallthru
      _
    // Predicated region
    $region66: #{dueling_q_forward.1} parent=1 // pred_check
      _
    $region67: #{dueling_q_forward.1} parent=1 // pred_check_branch
      %1214 = sbr.rel (0) target = $region69
    $region68: #{dueling_q_forward.1} parent=1 // pred_region
      _
    $region69: #{dueling_q_forward.1} parent=1 // pred_fallthru
      _
    %1215 = vsyncpa [#allocation3], 1
    %1216 = vsyncpa [#allocation5], 1
    %1217 = vsyncpa [#allocation8], 1
    %1218 = vsyncpa [#allocation11], 1

</llo_original>
